<compile_context>
chip_gen: v5e
topology: v5e:2x2
jax: 0.10.0
libtpu: 0.0.40
codegen_flags: <defaults>
</compile_context>

<pallas_src>
import jax
import jax.numpy as jnp
from jax import lax
from jax.experimental import pallas as pl
from jax.experimental.pallas import tpu as pltpu

LEAKY_SLOPE = 0.2


def _conv_module_d_kernel(x_ref, t_ref, w1_ref, b1_ref, w2_ref, b2_ref,
                          ph_ref, pw_ref, o_ref):
    # x_ref : (1, H, W*Cin)       bf16  input image, (w, c) packed on lanes
    # t_ref : (3, H, H)           bf16  row-shift matrices (zero rows at border)
    # w1_ref: (3*W*Cin,  W*Cout)  bf16  banded conv1 weights (W-padding folded in)
    # b1_ref: (1, W*Cout)         f32   conv1 bias tiled across w
    # w2_ref: (3*W*Cout, W*Cout)  bf16  banded conv2 weights
    # b2_ref: (1, W*Cout)         f32   conv2 bias tiled across w
    # ph_ref: (OH, H)             f32   row-pooling matrix (1/kh entries)
    # pw_ref: (W*Cout, OW*Cout)   f32   col-pooling matrix (1/kw entries)
    # o_ref : (1, OH, OW*Cout)    f32   pooled output (lane-dense)
    x = x_ref[0]                                            # (H, W*Cin) bf16

    def conv3x3(a_bf16, w_ref, b_ref):
        # ky = -1/0/+1 row shifts via tiny 0/1 matmuls (exact pass-through,
        # zero rows at the image border), lane-concatenated into one
        # im2col-style LHS, then a single fused MXU matmul per conv.
        slabs = [
            jnp.dot(t_ref[ky], a_bf16,
                    preferred_element_type=jnp.float32).astype(jnp.bfloat16)
            for ky in range(3)
        ]
        a_cat = jnp.concatenate(slabs, axis=1)              # (H, 3*W*C) bf16
        h = jnp.dot(a_cat, w_ref[...],
                    preferred_element_type=jnp.float32)     # (H, W*Cout) f32
        h = h + b_ref[...]
        return jnp.where(h > 0, h, LEAKY_SLOPE * h)

    h1 = conv3x3(x, w1_ref, b1_ref)                         # (H, W*Cout) f32
    h2 = conv3x3(h1.astype(jnp.bfloat16), w2_ref, b2_ref)   # (H, W*Cout) f32

    # AdaptiveAvgPool2d (uniform bins) as two small matmuls + one dense store.
    rows = jnp.dot(ph_ref[...], h2, preferred_element_type=jnp.float32)
    o_ref[0] = jnp.dot(rows, pw_ref[...], preferred_element_type=jnp.float32)


def _shift_mats(H, dtype):
    """(3, H, H) 0/1 matrices: T[ky] @ a selects rows h+ky-1 (zeros outside)."""
    h = jnp.arange(H)[:, None]
    r = jnp.arange(H)[None, :]
    return jnp.stack([(r == h + ky - 1) for ky in range(3)]).astype(dtype)


def _banded_weight(w_hwio, W):
    """(3,3,Cin,Cout) HWIO -> (3*W*Cin, W*Cout) banded conv matrix.

    Row index ky*(W*Cin) + w_in*Cin + ci matches the lane-concatenated
    [T0@a, T1@a, T2@a] LHS built in the kernel; zero padding along W is
    implicit (out-of-range taps are simply absent from the band).
    """
    _, _, Cin, Cout = w_hwio.shape
    wq = jnp.arange(W)[:, None, None]          # input column  w_in
    wo = jnp.arange(W)[None, :, None]          # output column w
    kx = jnp.arange(3)[None, None, :]
    sel = (wq - wo + 1 == kx).astype(w_hwio.dtype)           # (W, W, 3)
    bw = jnp.einsum('qok,ykcd->yqcod', sel, w_hwio)          # (3,W,Cin,W,Cout)
    return bw.reshape(3 * W * Cin, W * Cout)


def _pool_mats(H, W, OH, OW, Cout):
    """Exact uniform-bin average pooling as a left (rows) and right (cols) matmul."""
    kh, kw = H // OH, W // OW
    ph = ((jnp.arange(H)[None, :] // kh) == jnp.arange(OH)[:, None])
    ph = ph.astype(jnp.float32) / kh                                  # (OH, H)
    wsel = ((jnp.arange(W)[:, None] // kw) == jnp.arange(OW)[None, :])
    wsel = wsel.astype(jnp.float32) / kw                              # (W, OW)
    pw = jnp.einsum('wo,cd->wcod', wsel, jnp.eye(Cout, dtype=jnp.float32))
    return ph, pw.reshape(W * Cout, OW * Cout)


def conv_module_d_forward(x_nchw, params, out_size):
    """ConvModuleD(final=False).forward -> (x_TF, None, None); NCHW in/out."""
    w1, b1, w2, b2 = params["w1"], params["b1"], params["w2"], params["b2"]
    B, Cin, H, W = x_nchw.shape
    Cout = w1.shape[-1]
    OH = OW = out_size
    assert H % OH == 0 and W % OW == 0, \
        "kernel implements the uniform-bin case of AdaptiveAvgPool2d"

    # lane-dense row layout (B, H, W*Cin); bf16 halves input DMA and feeds the
    # MXU at full rate (accumulation stays f32 inside the kernel).
    x_rows = jnp.transpose(x_nchw, (0, 2, 3, 1)).reshape(B, H, W * Cin)
    x_rows = x_rows.astype(jnp.bfloat16)

    tmats = _shift_mats(H, jnp.bfloat16)                     # (3, H, H)
    bw1 = _banded_weight(w1, W).astype(jnp.bfloat16)         # (3*W*Cin,  W*Cout)
    bw2 = _banded_weight(w2, W).astype(jnp.bfloat16)         # (3*W*Cout, W*Cout)
    b1t = jnp.tile(b1.astype(jnp.float32), W)[None, :]       # (1, W*Cout)
    b2t = jnp.tile(b2.astype(jnp.float32), W)[None, :]       # (1, W*Cout)
    ph, pw = _pool_mats(H, W, OH, OW, Cout)

    out = pl.pallas_call(
        _conv_module_d_kernel,
        out_shape=jax.ShapeDtypeStruct((B, OH, OW * Cout), jnp.float32),
        grid_spec=pltpu.PrefetchScalarGridSpec(
            num_scalar_prefetch=0,
            grid=(B,),
            in_specs=[
                pl.BlockSpec((1, H, W * Cin), lambda b: (b, 0, 0)),
                pl.BlockSpec((3, H, H), lambda b: (0, 0, 0)),
                pl.BlockSpec((3 * W * Cin, W * Cout), lambda b: (0, 0)),
                pl.BlockSpec((1, W * Cout), lambda b: (0, 0)),
                pl.BlockSpec((3 * W * Cout, W * Cout), lambda b: (0, 0)),
                pl.BlockSpec((1, W * Cout), lambda b: (0, 0)),
                pl.BlockSpec((OH, H), lambda b: (0, 0)),
                pl.BlockSpec((W * Cout, OW * Cout), lambda b: (0, 0)),
            ],
            out_specs=pl.BlockSpec((1, OH, OW * Cout), lambda b: (b, 0, 0)),
        ),
        # "parallel" batch axis: on v7x the two TensorCores each take half the
        # batch; on v5e/v6e it is a short serial loop (B is tiny here).
        compiler_params=pltpu.CompilerParams(
            dimension_semantics=("parallel",)),
    )(x_rows, tmats, bw1, b1t, bw2, b2t, ph, pw)

    x_tf = jnp.transpose(out.reshape(B, OH, OW, Cout), (0, 3, 1, 2))  # NCHW
    return x_tf, None, None


def _reference(x_nchw, params, out_size):
    """Pure-JAX reference with matching bf16-input / f32-accumulate convs."""
    w1, b1, w2, b2 = params["w1"], params["b1"], params["w2"], params["b2"]
    dn = ("NCHW", "HWIO", "NCHW")
    y = lax.conv_general_dilated(
        x_nchw.astype(jnp.bfloat16), w1.astype(jnp.bfloat16), (1, 1), "SAME",
        dimension_numbers=dn, preferred_element_type=jnp.float32)
    y = y + b1[None, :, None, None]
    y = jnp.where(y > 0, y, LEAKY_SLOPE * y)
    y = lax.conv_general_dilated(
        y.astype(jnp.bfloat16), w2.astype(jnp.bfloat16), (1, 1), "SAME",
        dimension_numbers=dn, preferred_element_type=jnp.float32)
    y = y + b2[None, :, None, None]
    y = jnp.where(y > 0, y, LEAKY_SLOPE * y)
    B, C, H, W = y.shape
    kh, kw = H // out_size, W // out_size
    return y.reshape(B, C, out_size, kh, out_size, kw).mean(axis=(3, 5))


if __name__ == "__main__":
    B, Cin, Cout, H, W, OUT = 2, 4, 8, 16, 16, 8

    key = jax.random.PRNGKey(0)
    k_x, k_w1, k_b1, k_w2, k_b2 = jax.random.split(key, 5)
    x = jax.random.normal(k_x, (B, Cin, H, W), jnp.float32)
    params = {
        "w1": 0.1 * jax.random.normal(k_w1, (3, 3, Cin, Cout), jnp.float32),
        "b1": 0.1 * jax.random.normal(k_b1, (Cout,), jnp.float32),
        "w2": 0.1 * jax.random.normal(k_w2, (3, 3, Cout, Cout), jnp.float32),
        "b2": 0.1 * jax.random.normal(k_b2, (Cout,), jnp.float32),
    }

    x_tf, x_char, x_imp = conv_module_d_forward(x, params, OUT)
    jax.block_until_ready(x_tf)

    assert x_tf.shape == (B, Cout, OUT, OUT)
    assert x_char is None and x_imp is None
    ref = _reference(x, params, OUT)
    err = float(jnp.max(jnp.abs(x_tf - ref)))
    assert jnp.allclose(x_tf, ref, atol=1e-2, rtol=1e-2), err

    print("KERNEL_OK")
</pallas_src>

<mosaic_0001>
module attributes {stable_mosaic.version = 11 : i64} {
  func.func @_conv_module_d_kernel(%arg0: i32, %arg1: memref<1x16x64xbf16, #tpu.memory_space<vmem>>, %arg2: memref<3x16x16xbf16, #tpu.memory_space<vmem>>, %arg3: memref<192x128xbf16, #tpu.memory_space<vmem>>, %arg4: memref<1x128xf32, #tpu.memory_space<vmem>>, %arg5: memref<384x128xbf16, #tpu.memory_space<vmem>>, %arg6: memref<1x128xf32, #tpu.memory_space<vmem>>, %arg7: memref<8x16xf32, #tpu.memory_space<vmem>>, %arg8: memref<128x64xf32, #tpu.memory_space<vmem>>, %arg9: memref<1x8x64xf32, #tpu.memory_space<vmem>>) attributes {dimension_semantics = [#tpu.dimension_semantics<parallel>], iteration_bounds = array<i64: 2>, scalar_prefetch = 0 : i64, scratch_operands = 0 : i64, tpu.core_type = #tpu.core_type<tc>, window_params = [{transform_indices = @transform_0, window_bounds = array<i64: 1, 16, 64>}, {pipeline_mode = #tpu.pipeline_mode<synchronous>, transform_indices = @transform_1, window_bounds = array<i64: 3, 16, 16>}, {pipeline_mode = #tpu.pipeline_mode<synchronous>, transform_indices = @transform_2, window_bounds = array<i64: 192, 128>}, {pipeline_mode = #tpu.pipeline_mode<synchronous>, transform_indices = @transform_3, window_bounds = array<i64: 1, 128>}, {pipeline_mode = #tpu.pipeline_mode<synchronous>, transform_indices = @transform_4, window_bounds = array<i64: 384, 128>}, {pipeline_mode = #tpu.pipeline_mode<synchronous>, transform_indices = @transform_5, window_bounds = array<i64: 1, 128>}, {pipeline_mode = #tpu.pipeline_mode<synchronous>, transform_indices = @transform_6, window_bounds = array<i64: 8, 16>}, {pipeline_mode = #tpu.pipeline_mode<synchronous>, transform_indices = @transform_7, window_bounds = array<i64: 128, 64>}, {transform_indices = @transform_8, window_bounds = array<i64: 1, 8, 64>}]} {
    %c0 = arith.constant 0 : index
    %c0_0 = arith.constant 0 : index
    %c0_1 = arith.constant 0 : index
    %0 = vector.load %arg1[%c0, %c0_0, %c0_1] : memref<1x16x64xbf16, #tpu.memory_space<vmem>>, vector<1x16x64xbf16>
    %1 = vector.shape_cast %0 : vector<1x16x64xbf16> to vector<16x64xbf16>
    %c0_2 = arith.constant 0 : index
    %c0_3 = arith.constant 0 : index
    %c0_4 = arith.constant 0 : index
    %2 = vector.load %arg2[%c0_2, %c0_3, %c0_4] : memref<3x16x16xbf16, #tpu.memory_space<vmem>>, vector<1x16x16xbf16>
    %3 = vector.shape_cast %2 : vector<1x16x16xbf16> to vector<16x16xbf16>
    %cst = arith.constant dense<0.000000e+00> : vector<16x64xf32>
    %4 = tpu.matmul %3, %1, %cst {dimension_numbers = #tpu.dot_dimension_numbers<[1], [0], [0], [1], [0, 0, 1, 1], [], []>} : vector<16x16xbf16>, vector<16x64xbf16>, vector<16x64xf32> -> vector<16x64xf32>
    %5 = arith.truncf %4 : vector<16x64xf32> to vector<16x64xbf16>
    %c1 = arith.constant 1 : index
    %c0_5 = arith.constant 0 : index
    %c0_6 = arith.constant 0 : index
    %6 = vector.load %arg2[%c1, %c0_5, %c0_6] : memref<3x16x16xbf16, #tpu.memory_space<vmem>>, vector<1x16x16xbf16>
    %7 = vector.shape_cast %6 : vector<1x16x16xbf16> to vector<16x16xbf16>
    %cst_7 = arith.constant dense<0.000000e+00> : vector<16x64xf32>
    %8 = tpu.matmul %7, %1, %cst_7 {dimension_numbers = #tpu.dot_dimension_numbers<[1], [0], [0], [1], [0, 0, 1, 1], [], []>} : vector<16x16xbf16>, vector<16x64xbf16>, vector<16x64xf32> -> vector<16x64xf32>
    %9 = arith.truncf %8 : vector<16x64xf32> to vector<16x64xbf16>
    %c2 = arith.constant 2 : index
    %c0_8 = arith.constant 0 : index
    %c0_9 = arith.constant 0 : index
    %10 = vector.load %arg2[%c2, %c0_8, %c0_9] : memref<3x16x16xbf16, #tpu.memory_space<vmem>>, vector<1x16x16xbf16>
    %11 = vector.shape_cast %10 : vector<1x16x16xbf16> to vector<16x16xbf16>
    %cst_10 = arith.constant dense<0.000000e+00> : vector<16x64xf32>
    %12 = tpu.matmul %11, %1, %cst_10 {dimension_numbers = #tpu.dot_dimension_numbers<[1], [0], [0], [1], [0, 0, 1, 1], [], []>} : vector<16x16xbf16>, vector<16x64xbf16>, vector<16x64xf32> -> vector<16x64xf32>
    %13 = arith.truncf %12 : vector<16x64xf32> to vector<16x64xbf16>
    %14 = tpu.concatenate %5, %9, %13 in 1 : vector<16x64xbf16>, vector<16x64xbf16>, vector<16x64xbf16> -> vector<16x192xbf16>
    %c0_11 = arith.constant 0 : index
    %c0_12 = arith.constant 0 : index
    %15 = vector.load %arg3[%c0_11, %c0_12] : memref<192x128xbf16, #tpu.memory_space<vmem>>, vector<192x128xbf16>
    %cst_13 = arith.constant dense<0.000000e+00> : vector<16x128xf32>
    %16 = tpu.matmul %14, %15, %cst_13 {dimension_numbers = #tpu.dot_dimension_numbers<[1], [0], [0], [1], [0, 0, 1, 1], [], []>} : vector<16x192xbf16>, vector<192x128xbf16>, vector<16x128xf32> -> vector<16x128xf32>
    %c0_14 = arith.constant 0 : index
    %c0_15 = arith.constant 0 : index
    %17 = vector.load %arg4[%c0_14, %c0_15] : memref<1x128xf32, #tpu.memory_space<vmem>>, vector<1x128xf32>
    %18 = vector.broadcast %17 : vector<1x128xf32> to vector<16x128xf32>
    %19 = arith.addf %16, %18 : vector<16x128xf32>
    %cst_16 = arith.constant 0.000000e+00 : f32
    %20 = vector.broadcast %cst_16 : f32 to vector<16x128xf32>
    %21 = arith.cmpf ogt, %19, %20 : vector<16x128xf32>
    %cst_17 = arith.constant 2.000000e-01 : f32
    %22 = vector.broadcast %cst_17 : f32 to vector<16x128xf32>
    %23 = arith.mulf %22, %19 : vector<16x128xf32>
    %24 = arith.select %21, %19, %23 : vector<16x128xi1>, vector<16x128xf32>
    %25 = arith.truncf %24 : vector<16x128xf32> to vector<16x128xbf16>
    %c0_18 = arith.constant 0 : index
    %c0_19 = arith.constant 0 : index
    %c0_20 = arith.constant 0 : index
    %26 = vector.load %arg2[%c0_18, %c0_19, %c0_20] : memref<3x16x16xbf16, #tpu.memory_space<vmem>>, vector<1x16x16xbf16>
    %27 = vector.shape_cast %26 : vector<1x16x16xbf16> to vector<16x16xbf16>
    %cst_21 = arith.constant dense<0.000000e+00> : vector<16x128xf32>
    %28 = tpu.matmul %27, %25, %cst_21 {dimension_numbers = #tpu.dot_dimension_numbers<[1], [0], [0], [1], [0, 0, 1, 1], [], []>} : vector<16x16xbf16>, vector<16x128xbf16>, vector<16x128xf32> -> vector<16x128xf32>
    %29 = arith.truncf %28 : vector<16x128xf32> to vector<16x128xbf16>
    %c1_22 = arith.constant 1 : index
    %c0_23 = arith.constant 0 : index
    %c0_24 = arith.constant 0 : index
    %30 = vector.load %arg2[%c1_22, %c0_23, %c0_24] : memref<3x16x16xbf16, #tpu.memory_space<vmem>>, vector<1x16x16xbf16>
    %31 = vector.shape_cast %30 : vector<1x16x16xbf16> to vector<16x16xbf16>
    %cst_25 = arith.constant dense<0.000000e+00> : vector<16x128xf32>
    %32 = tpu.matmul %31, %25, %cst_25 {dimension_numbers = #tpu.dot_dimension_numbers<[1], [0], [0], [1], [0, 0, 1, 1], [], []>} : vector<16x16xbf16>, vector<16x128xbf16>, vector<16x128xf32> -> vector<16x128xf32>
    %33 = arith.truncf %32 : vector<16x128xf32> to vector<16x128xbf16>
    %c2_26 = arith.constant 2 : index
    %c0_27 = arith.constant 0 : index
    %c0_28 = arith.constant 0 : index
    %34 = vector.load %arg2[%c2_26, %c0_27, %c0_28] : memref<3x16x16xbf16, #tpu.memory_space<vmem>>, vector<1x16x16xbf16>
    %35 = vector.shape_cast %34 : vector<1x16x16xbf16> to vector<16x16xbf16>
    %cst_29 = arith.constant dense<0.000000e+00> : vector<16x128xf32>
    %36 = tpu.matmul %35, %25, %cst_29 {dimension_numbers = #tpu.dot_dimension_numbers<[1], [0], [0], [1], [0, 0, 1, 1], [], []>} : vector<16x16xbf16>, vector<16x128xbf16>, vector<16x128xf32> -> vector<16x128xf32>
    %37 = arith.truncf %36 : vector<16x128xf32> to vector<16x128xbf16>
    %38 = tpu.concatenate %29, %33, %37 in 1 : vector<16x128xbf16>, vector<16x128xbf16>, vector<16x128xbf16> -> vector<16x384xbf16>
    %c0_30 = arith.constant 0 : index
    %c0_31 = arith.constant 0 : index
    %39 = vector.load %arg5[%c0_30, %c0_31] : memref<384x128xbf16, #tpu.memory_space<vmem>>, vector<384x128xbf16>
    %cst_32 = arith.constant dense<0.000000e+00> : vector<16x128xf32>
    %40 = tpu.matmul %38, %39, %cst_32 {dimension_numbers = #tpu.dot_dimension_numbers<[1], [0], [0], [1], [0, 0, 1, 1], [], []>} : vector<16x384xbf16>, vector<384x128xbf16>, vector<16x128xf32> -> vector<16x128xf32>
    %c0_33 = arith.constant 0 : index
    %c0_34 = arith.constant 0 : index
    %41 = vector.load %arg6[%c0_33, %c0_34] : memref<1x128xf32, #tpu.memory_space<vmem>>, vector<1x128xf32>
    %42 = vector.broadcast %41 : vector<1x128xf32> to vector<16x128xf32>
    %43 = arith.addf %40, %42 : vector<16x128xf32>
    %cst_35 = arith.constant 0.000000e+00 : f32
    %44 = vector.broadcast %cst_35 : f32 to vector<16x128xf32>
    %45 = arith.cmpf ogt, %43, %44 : vector<16x128xf32>
    %cst_36 = arith.constant 2.000000e-01 : f32
    %46 = vector.broadcast %cst_36 : f32 to vector<16x128xf32>
    %47 = arith.mulf %46, %43 : vector<16x128xf32>
    %48 = arith.select %45, %43, %47 : vector<16x128xi1>, vector<16x128xf32>
    %c0_37 = arith.constant 0 : index
    %c0_38 = arith.constant 0 : index
    %49 = vector.load %arg7[%c0_37, %c0_38] : memref<8x16xf32, #tpu.memory_space<vmem>>, vector<8x16xf32>
    %cst_39 = arith.constant dense<0.000000e+00> : vector<8x128xf32>
    %50 = tpu.matmul %49, %48, %cst_39 {dimension_numbers = #tpu.dot_dimension_numbers<[1], [0], [0], [1], [0, 0, 1, 1], [], []>} : vector<8x16xf32>, vector<16x128xf32>, vector<8x128xf32> -> vector<8x128xf32>
    %c0_40 = arith.constant 0 : index
    %c0_41 = arith.constant 0 : index
    %51 = vector.load %arg8[%c0_40, %c0_41] : memref<128x64xf32, #tpu.memory_space<vmem>>, vector<128x64xf32>
    %cst_42 = arith.constant dense<0.000000e+00> : vector<8x64xf32>
    %52 = tpu.matmul %50, %51, %cst_42 {dimension_numbers = #tpu.dot_dimension_numbers<[1], [0], [0], [1], [0, 0, 1, 1], [], []>} : vector<8x128xf32>, vector<128x64xf32>, vector<8x64xf32> -> vector<8x64xf32>
    %c0_43 = arith.constant 0 : index
    %c0_44 = arith.constant 0 : index
    %c0_45 = arith.constant 0 : index
    %53 = vector.load %arg9[%c0_43, %c0_44, %c0_45] : memref<1x8x64xf32, #tpu.memory_space<vmem>>, vector<1x8x64xf32>
    %54 = vector.shape_cast %53 : vector<1x8x64xf32> to vector<8x64xf32>
    %55 = vector.shape_cast %52 : vector<8x64xf32> to vector<1x8x64xf32>
    tpu.vector_store %arg9[%c0_43, %c0_44, %c0_45], %55 {strides = array<i32>} : memref<1x8x64xf32, #tpu.memory_space<vmem>>, vector<1x8x64xf32>,
    return
  }
  func.func @transform_0(%arg0: i32) -> (i32, i32, i32) {
    %c0_i32 = arith.constant 0 : i32
    %c0_i32_0 = arith.constant 0 : i32
    %c0_i32_1 = arith.constant 0 : i32
    return %arg0, %c0_i32, %c0_i32_0 : i32, i32, i32
  }
  func.func @transform_1(%arg0: i32) -> (i32, i32, i32) {
    %c0_i32 = arith.constant 0 : i32
    %c0_i32_0 = arith.constant 0 : i32
    %c0_i32_1 = arith.constant 0 : i32
    %c0_i32_2 = arith.constant 0 : i32
    return %c0_i32, %c0_i32_0, %c0_i32_1 : i32, i32, i32
  }
  func.func @transform_2(%arg0: i32) -> (i32, i32) {
    %c0_i32 = arith.constant 0 : i32
    %c0_i32_0 = arith.constant 0 : i32
    %c0_i32_1 = arith.constant 0 : i32
    return %c0_i32, %c0_i32_0 : i32, i32
  }
  func.func @transform_3(%arg0: i32) -> (i32, i32) {
    %c0_i32 = arith.constant 0 : i32
    %c0_i32_0 = arith.constant 0 : i32
    %c0_i32_1 = arith.constant 0 : i32
    return %c0_i32, %c0_i32_0 : i32, i32
  }
  func.func @transform_4(%arg0: i32) -> (i32, i32) {
    %c0_i32 = arith.constant 0 : i32
    %c0_i32_0 = arith.constant 0 : i32
    %c0_i32_1 = arith.constant 0 : i32
    return %c0_i32, %c0_i32_0 : i32, i32
  }
  func.func @transform_5(%arg0: i32) -> (i32, i32) {
    %c0_i32 = arith.constant 0 : i32
    %c0_i32_0 = arith.constant 0 : i32
    %c0_i32_1 = arith.constant 0 : i32
    return %c0_i32, %c0_i32_0 : i32, i32
  }
  func.func @transform_6(%arg0: i32) -> (i32, i32) {
    %c0_i32 = arith.constant 0 : i32
    %c0_i32_0 = arith.constant 0 : i32
    %c0_i32_1 = arith.constant 0 : i32
    return %c0_i32, %c0_i32_0 : i32, i32
  }
  func.func @transform_7(%arg0: i32) -> (i32, i32) {
    %c0_i32 = arith.constant 0 : i32
    %c0_i32_0 = arith.constant 0 : i32
    %c0_i32_1 = arith.constant 0 : i32
    return %c0_i32, %c0_i32_0 : i32, i32
  }
  func.func @transform_8(%arg0: i32) -> (i32, i32, i32) {
    %c0_i32 = arith.constant 0 : i32
    %c0_i32_0 = arith.constant 0 : i32
    %c0_i32_1 = arith.constant 0 : i32
    return %arg0, %c0_i32, %c0_i32_0 : i32, i32, i32
  }
}

</mosaic_0001>

<llo_original>
// kernel: tpu_custom_call.1
$region0: #{tpu_custom_call.1}
  #allocation0 [shape = 'u32[]', space=smem, size = 0x4, offset = 0x4, fixed_abs, tag = 'smem constant byte address 0x4 - core index']
  #allocation1 [shape = 'u32[72,128]{1,0:T(1,128)}', space=vmem, size = 0x9000, scoped, tag = 'internal scratch']
  %s0 = inlined_call_operand.hbm [shape: bf16[2,16,64], index: 0, kind: input, shape index: {}]
  %s1 = inlined_call_operand.hbm [shape: bf16[3,16,16], index: 1, kind: input, shape index: {}]
  %s2 = inlined_call_operand.hbm [shape: bf16[192,128], index: 2, kind: input, shape index: {}]
  %s3 = inlined_call_operand.vmem [shape: f32[1,128], index: 3, kind: input, shape index: {}]
  %s4 = inlined_call_operand.vmem [shape: bf16[384,128], index: 4, kind: input, shape index: {}]
  %s5 = inlined_call_operand.vmem [shape: f32[1,128], index: 5, kind: input, shape index: {}]
  %s6 = inlined_call_operand.hbm [shape: f32[8,16], index: 6, kind: input, shape index: {}]
  %s7 = inlined_call_operand.vmem [shape: f32[128,64], index: 7, kind: input, shape index: {}]
  %s8 = inlined_call_operand.hbm [shape: f32[2,8,64], index: 8, kind: output, shape index: {}]
  %s9 = sld [smem:[#allocation0]]
  $region81: #{tpu_custom_call.1} parent=0
    _
  %s11 = ssub.s32 1, %s9
  %s12 = scalar_select 0, %s11, %s9
  $region1: #{tpu_custom_call.1} parent=0
    #allocation2 [shape = 'u8[8192]{0}', space=vmem, size = 0x2000, scoped, tag = 'input window, operand 0']
    #allocation3 [shape = 's32[2]{0}', space=sflag, size = 0x8, scoped, tag = 'scoped memory for tpu_custom_call.1']
    #allocation4 [shape = 's32[2]{0}', space=sflag, size = 0x8, scoped, tag = 'scoped memory for tpu_custom_call.1']
    #allocation5 [shape = 'u8[12288]{0}', space=vmem, size = 0x3000, scoped, tag = 'input window, operand 1, single buffered']
    #allocation6 [shape = 's32[1]{0}', space=sflag, size = 0x4, scoped, tag = 'scoped memory for tpu_custom_call.1']
    #allocation7 [shape = 'u8[49152]{0}', space=vmem, size = 0xc000, scoped, tag = 'input window, operand 2, single buffered']
    #allocation8 [shape = 'u8[4096]{0}', space=vmem, size = 0x1000, scoped, tag = 'input window, operand 6, single buffered']
    #allocation9 [shape = 's32[1]{0}', space=sflag, size = 0x4, scoped, tag = 'scoped memory for tpu_custom_call.1']
    #allocation10 [shape = 'u8[8192]{0}', space=vmem, size = 0x2000, scoped, tag = 'output window, operand 0']
    %13 = vsyncpa [#allocation3], 0
    %s14 = scalar_lea.sflag [#allocation3], 1
    %15 = vsyncpa %s14, 0
    %16 = vsyncpa [#allocation6], 0
    %17 = vsyncpa [#allocation9], 0
    %18 = vsyncpa [#allocation4], 0
    %s19 = scalar_lea.sflag [#allocation4], 1
    %20 = vsyncpa %s19, 0
    loop: start=0, step=1, limit=4
    $region2: #{tpu_custom_call.1} parent=1 // loop_pre_header
      _
    $region3: #{tpu_custom_call.1} parent=1 // loop_header
      %s22 = sphi 0, %s26
      %p23 = scmp.ge.s32.totalorder %s22, 4
      %s32 = sphi 0, %s34
      %s35 = sphi 0, %s32
      %s36 = sphi 0, %s35
      %s52 = sphi 0, %s36
      %s56 = sphi 0, %s56
      %s58 = sphi 0, %s56
      %s59 = sphi 0, %s58
      %s73 = sphi 0, %s59
      %s77 = sphi 0, %s77
      %s79 = sphi 0, %s77
      %s80 = sphi 0, %s79
      %s94 = sphi 0, %s80
      %s98 = sphi 0, %s98
      %s100 = sphi 0, %s98
      %s101 = sphi 0, %s100
      %s115 = sphi 0, %s101
      %s119 = sphi 0, %s119
      %s121 = sphi 0, %s119
      %s122 = sphi 0, %s121
      %s136 = sphi 0, %s122
      %s140 = sphi 0, %s140
      %s142 = sphi 0, %s140
      %s143 = sphi 0, %s142
      %s157 = sphi 0, %s143
      %s161 = sphi 0, %s161
      %s163 = sphi 0, %s161
      %s164 = sphi 0, %s163
      %s178 = sphi 0, %s164
      %s182 = sphi 0, %s182
      %s184 = sphi 0, %s182
      %s185 = sphi 0, %s184
      %s199 = sphi 0, %s185
      %s205 = sphi 0, %s207
      %s208 = sphi 0, %s205
      %s209 = sphi 0, %s208
      %s225 = sphi 0, %s209
    $region4: #{tpu_custom_call.1} parent=1 // loop_header_branch
      %25 = sbr.rel (%p23) target = $region8
    $region5: #{tpu_custom_call.1} parent=1 // loop_body
      %s27 = ssub.s32 %s22, 1
      %s28 = ssub.s32 %s22, 2
      %s29 = sadd.s32 %s22, 1
      %s30 = ssub.s32 %s22, %s29
      %p31 = scmp.eq.s32.totalorder %s30, 0
      %s33 = sadd.s32 %s32, 1
      %s34 = scalar_select %p31, %s32, %s33
      %p37 = pneg %p31
      %p38 = scmp.eq.s32.totalorder %s22, 1
      %p39 = por %p37, %p38
      %p40 = scmp.ne.s32.totalorder %s32, %s35
      %p41 = scmp.eq.s32.totalorder %s22, 0
      %p42 = por %p40, %p41
      %p43 = scmp.ne.s32.totalorder %s32, %s35
      %p44 = scmp.eq.s32.totalorder %s27, 1
      %p45 = por %p43, %p44
      %p46 = scmp.ne.s32.totalorder %s35, %s36
      %p47 = scmp.eq.s32.totalorder %s27, 0
      %p48 = por %p46, %p47
      %p49 = scmp.ne.s32.totalorder %s35, %s36
      %p50 = scmp.eq.s32.totalorder %s28, 1
      %p51 = por %p49, %p50
      %p53 = scmp.ne.s32.totalorder %s36, %s52
      %p54 = scmp.eq.s32.totalorder %s28, 0
      %p55 = por %p53, %p54
      %s57 = sadd.s32 %s56, 1
      %p60 = scmp.eq.s32.totalorder %s22, 1
      %p61 = scmp.ne.s32.totalorder %s56, %s58
      %p62 = scmp.eq.s32.totalorder %s22, 0
      %p63 = por %p61, %p62
      %p64 = scmp.ne.s32.totalorder %s56, %s58
      %p65 = scmp.eq.s32.totalorder %s27, 1
      %p66 = por %p64, %p65
      %p67 = scmp.ne.s32.totalorder %s58, %s59
      %p68 = scmp.eq.s32.totalorder %s27, 0
      %p69 = por %p67, %p68
      %p70 = scmp.ne.s32.totalorder %s58, %s59
      %p71 = scmp.eq.s32.totalorder %s28, 1
      %p72 = por %p70, %p71
      %p74 = scmp.ne.s32.totalorder %s59, %s73
      %p75 = scmp.eq.s32.totalorder %s28, 0
      %p76 = por %p74, %p75
      %s78 = sadd.s32 %s77, 1
      %p81 = scmp.eq.s32.totalorder %s22, 1
      %p82 = scmp.ne.s32.totalorder %s77, %s79
      %p83 = scmp.eq.s32.totalorder %s22, 0
      %p84 = por %p82, %p83
      %p85 = scmp.ne.s32.totalorder %s77, %s79
      %p86 = scmp.eq.s32.totalorder %s27, 1
      %p87 = por %p85, %p86
      %p88 = scmp.ne.s32.totalorder %s79, %s80
      %p89 = scmp.eq.s32.totalorder %s27, 0
      %p90 = por %p88, %p89
      %p91 = scmp.ne.s32.totalorder %s79, %s80
      %p92 = scmp.eq.s32.totalorder %s28, 1
      %p93 = por %p91, %p92
      %p95 = scmp.ne.s32.totalorder %s80, %s94
      %p96 = scmp.eq.s32.totalorder %s28, 0
      %p97 = por %p95, %p96
      %s99 = sadd.s32 %s98, 1
      %p102 = scmp.eq.s32.totalorder %s22, 1
      %p103 = scmp.ne.s32.totalorder %s98, %s100
      %p104 = scmp.eq.s32.totalorder %s22, 0
      %p105 = por %p103, %p104
      %p106 = scmp.ne.s32.totalorder %s98, %s100
      %p107 = scmp.eq.s32.totalorder %s27, 1
      %p108 = por %p106, %p107
      %p109 = scmp.ne.s32.totalorder %s100, %s101
      %p110 = scmp.eq.s32.totalorder %s27, 0
      %p111 = por %p109, %p110
      %p112 = scmp.ne.s32.totalorder %s100, %s101
      %p113 = scmp.eq.s32.totalorder %s28, 1
      %p114 = por %p112, %p113
      %p116 = scmp.ne.s32.totalorder %s101, %s115
      %p117 = scmp.eq.s32.totalorder %s28, 0
      %p118 = por %p116, %p117
      %s120 = sadd.s32 %s119, 1
      %p123 = scmp.eq.s32.totalorder %s22, 1
      %p124 = scmp.ne.s32.totalorder %s119, %s121
      %p125 = scmp.eq.s32.totalorder %s22, 0
      %p126 = por %p124, %p125
      %p127 = scmp.ne.s32.totalorder %s119, %s121
      %p128 = scmp.eq.s32.totalorder %s27, 1
      %p129 = por %p127, %p128
      %p130 = scmp.ne.s32.totalorder %s121, %s122
      %p131 = scmp.eq.s32.totalorder %s27, 0
      %p132 = por %p130, %p131
      %p133 = scmp.ne.s32.totalorder %s121, %s122
      %p134 = scmp.eq.s32.totalorder %s28, 1
      %p135 = por %p133, %p134
      %p137 = scmp.ne.s32.totalorder %s122, %s136
      %p138 = scmp.eq.s32.totalorder %s28, 0
      %p139 = por %p137, %p138
      %s141 = sadd.s32 %s140, 1
      %p144 = scmp.eq.s32.totalorder %s22, 1
      %p145 = scmp.ne.s32.totalorder %s140, %s142
      %p146 = scmp.eq.s32.totalorder %s22, 0
      %p147 = por %p145, %p146
      %p148 = scmp.ne.s32.totalorder %s140, %s142
      %p149 = scmp.eq.s32.totalorder %s27, 1
      %p150 = por %p148, %p149
      %p151 = scmp.ne.s32.totalorder %s142, %s143
      %p152 = scmp.eq.s32.totalorder %s27, 0
      %p153 = por %p151, %p152
      %p154 = scmp.ne.s32.totalorder %s142, %s143
      %p155 = scmp.eq.s32.totalorder %s28, 1
      %p156 = por %p154, %p155
      %p158 = scmp.ne.s32.totalorder %s143, %s157
      %p159 = scmp.eq.s32.totalorder %s28, 0
      %p160 = por %p158, %p159
      %s162 = sadd.s32 %s161, 1
      %p165 = scmp.eq.s32.totalorder %s22, 1
      %p166 = scmp.ne.s32.totalorder %s161, %s163
      %p167 = scmp.eq.s32.totalorder %s22, 0
      %p168 = por %p166, %p167
      %p169 = scmp.ne.s32.totalorder %s161, %s163
      %p170 = scmp.eq.s32.totalorder %s27, 1
      %p171 = por %p169, %p170
      %p172 = scmp.ne.s32.totalorder %s163, %s164
      %p173 = scmp.eq.s32.totalorder %s27, 0
      %p174 = por %p172, %p173
      %p175 = scmp.ne.s32.totalorder %s163, %s164
      %p176 = scmp.eq.s32.totalorder %s28, 1
      %p177 = por %p175, %p176
      %p179 = scmp.ne.s32.totalorder %s164, %s178
      %p180 = scmp.eq.s32.totalorder %s28, 0
      %p181 = por %p179, %p180
      %s183 = sadd.s32 %s182, 1
      %p186 = scmp.eq.s32.totalorder %s22, 1
      %p187 = scmp.ne.s32.totalorder %s182, %s184
      %p188 = scmp.eq.s32.totalorder %s22, 0
      %p189 = por %p187, %p188
      %p190 = scmp.ne.s32.totalorder %s182, %s184
      %p191 = scmp.eq.s32.totalorder %s27, 1
      %p192 = por %p190, %p191
      %p193 = scmp.ne.s32.totalorder %s184, %s185
      %p194 = scmp.eq.s32.totalorder %s27, 0
      %p195 = por %p193, %p194
      %p196 = scmp.ne.s32.totalorder %s184, %s185
      %p197 = scmp.eq.s32.totalorder %s28, 1
      %p198 = por %p196, %p197
      %p200 = scmp.ne.s32.totalorder %s185, %s199
      %p201 = scmp.eq.s32.totalorder %s28, 0
      %p202 = por %p200, %p201
      %s203 = ssub.s32 %s22, %s29
      %p204 = scmp.eq.s32.totalorder %s203, 0
      %s206 = sadd.s32 %s205, 1
      %s207 = scalar_select %p204, %s205, %s206
      %p210 = pneg %p204
      %p211 = scmp.eq.s32.totalorder %s22, 1
      %p212 = por %p210, %p211
      %p213 = scmp.ne.s32.totalorder %s205, %s208
      %p214 = scmp.eq.s32.totalorder %s22, 0
      %p215 = por %p213, %p214
      %p216 = scmp.ne.s32.totalorder %s205, %s208
      %p217 = scmp.eq.s32.totalorder %s27, 1
      %p218 = por %p216, %p217
      %p219 = scmp.ne.s32.totalorder %s208, %s209
      %p220 = scmp.eq.s32.totalorder %s27, 0
      %p221 = por %p219, %p220
      %p222 = scmp.ne.s32.totalorder %s208, %s209
      %p223 = scmp.eq.s32.totalorder %s28, 1
      %p224 = por %p222, %p223
      %p226 = scmp.ne.s32.totalorder %s209, %s225
      %p227 = scmp.eq.s32.totalorder %s28, 0
      %p228 = por %p226, %p227
      %p229 = scmp.le.s32.totalorder 1, %s22
      %p230 = scmp.lt.s32.totalorder %s22, 3
      %p231 = pnand %p229, %p230
      %p232 = pneg %p231
      // Predicated region
      $region9: #{tpu_custom_call.1} parent=5 // pred_check
        _
      $region10: #{tpu_custom_call.1} parent=5 // pred_check_branch
        %234 = sbr.rel (%p231) target = $region12
      $region11: #{tpu_custom_call.1} parent=5 // pred_region
        %s235 = ssub.s32 %s22, 1
        // Predicated region
        $region13: #{tpu_custom_call.1} parent=11 // pred_check
          %p236 = pneg %p69
        $region14: #{tpu_custom_call.1} parent=11 // pred_check_branch
          %238 = sbr.rel (%p236) target = $region16
        $region15: #{tpu_custom_call.1} parent=11 // pred_region
          %240 = vsyncadd [#allocation6], 0
          %s241 = sshll.u32 %s1, 4
          %s242 = int_to_ptr.hbm [resolvable:$true] %s241
          %s243 = sshll.u32 [#allocation5], 4
          %s244 = int_to_ptr.vmem [resolvable:$true] %s243
          %249 = dma.hbm_to_vmem [thread:$0]  %s242, 384, %s244, [#allocation6], 64, 64, 4
        $region16: #{tpu_custom_call.1} parent=11 // pred_fallthru
          _
        // Predicated region
        $region17: #{tpu_custom_call.1} parent=11 // pred_check
          %p250 = pneg %p90
        $region18: #{tpu_custom_call.1} parent=11 // pred_check_branch
          %252 = sbr.rel (%p250) target = $region20
        $region19: #{tpu_custom_call.1} parent=11 // pred_region
          %254 = vsyncadd [#allocation6], 0
          %s255 = sshll.u32 %s2, 4
          %s256 = int_to_ptr.hbm [resolvable:$true] %s255
          %s257 = sshll.u32 [#allocation7], 4
          %s258 = int_to_ptr.vmem [resolvable:$true] %s257
          %263 = dma.hbm_to_vmem [thread:$0]  %s256, 1536, %s258, [#allocation6], 64, 64, 4
        $region20: #{tpu_custom_call.1} parent=11 // pred_fallthru
          _
        // Predicated region
        $region21: #{tpu_custom_call.1} parent=11 // pred_check
          %p264 = pneg %p111
        $region22: #{tpu_custom_call.1} parent=11 // pred_check_branch
          %266 = sbr.rel (%p264) target = $region24
        $region23: #{tpu_custom_call.1} parent=11 // pred_region
          _
        $region24: #{tpu_custom_call.1} parent=11 // pred_fallthru
          _
        // Predicated region
        $region25: #{tpu_custom_call.1} parent=11 // pred_check
          %p267 = pneg %p132
        $region26: #{tpu_custom_call.1} parent=11 // pred_check_branch
          %269 = sbr.rel (%p267) target = $region28
        $region27: #{tpu_custom_call.1} parent=11 // pred_region
          _
        $region28: #{tpu_custom_call.1} parent=11 // pred_fallthru
          _
        // Predicated region
        $region29: #{tpu_custom_call.1} parent=11 // pred_check
          %p270 = pneg %p153
        $region30: #{tpu_custom_call.1} parent=11 // pred_check_branch
          %272 = sbr.rel (%p270) target = $region32
        $region31: #{tpu_custom_call.1} parent=11 // pred_region
          _
        $region32: #{tpu_custom_call.1} parent=11 // pred_fallthru
          _
        // Predicated region
        $region33: #{tpu_custom_call.1} parent=11 // pred_check
          %p273 = pneg %p174
        $region34: #{tpu_custom_call.1} parent=11 // pred_check_branch
          %275 = sbr.rel (%p273) target = $region36
        $region35: #{tpu_custom_call.1} parent=11 // pred_region
          %277 = vsyncadd [#allocation9], 0
          %s279 = sshll.u32 %s6, 4
          %s280 = int_to_ptr.hbm [resolvable:$true] %s279
          %s281 = sshll.u32 [#allocation8], 4
          %s282 = int_to_ptr.vmem [resolvable:$true] %s281
          %284 = dma.hbm_to_vmem [thread:$0]  %s280, 128, %s282, [#allocation9]
        $region36: #{tpu_custom_call.1} parent=11 // pred_fallthru
          _
        // Predicated region
        $region37: #{tpu_custom_call.1} parent=11 // pred_check
          %p285 = pneg %p195
        $region38: #{tpu_custom_call.1} parent=11 // pred_check_branch
          %287 = sbr.rel (%p285) target = $region40
        $region39: #{tpu_custom_call.1} parent=11 // pred_region
          _
        $region40: #{tpu_custom_call.1} parent=11 // pred_fallthru
          _
      $region12: #{tpu_custom_call.1} parent=5 // pred_fallthru
        _
      %p288 = scmp.lt.s32.totalorder %s22, 2
      // Predicated region
      $region41: #{tpu_custom_call.1} parent=5 // pred_check
        %p289 = pneg %p288
      $region42: #{tpu_custom_call.1} parent=5 // pred_check_branch
        %291 = sbr.rel (%p289) target = $region44
      $region43: #{tpu_custom_call.1} parent=5 // pred_region
        // Predicated region
        $region45: #{tpu_custom_call.1} parent=43 // pred_check
          %p292 = pneg %p42
        $region46: #{tpu_custom_call.1} parent=43 // pred_check_branch
          %294 = sbr.rel (%p292) target = $region48
        $region47: #{tpu_custom_call.1} parent=43 // pred_region
          %s295 = sand.u32 %s32, 1
          %s296 = scalar_lea.sflag [#allocation3], %s295
          %s297 = sand.u32 %s32, 1
          %s298 = smul.addr %s297, 8
          %s299 = scalar_lea.vmem [#allocation2], %s298
          %301 = vsyncadd %s296, 0
          %s302 = smul.addr %s22, 2
          %s303 = smul.addr %s302, 4
          %s304 = scalar_lea.hbm %s0, %s303
          %s305 = sshll.u32 %s304, 4
          %s306 = int_to_ptr.hbm [resolvable:$true] %s305
          %s307 = sshll.u32 %s299, 4
          %s308 = int_to_ptr.vmem [resolvable:$true] %s307
          %313 = dma.hbm_to_vmem [thread:$0]  %s306, 128, %s308, %s296, 64, 64, 4
        $region48: #{tpu_custom_call.1} parent=43 // pred_fallthru
          _
      $region44: #{tpu_custom_call.1} parent=5 // pred_fallthru
        _
      %p314 = scmp.le.s32.totalorder 1, %s22
      %p315 = scmp.lt.s32.totalorder %s22, 3
      %p316 = pnand %p314, %p315
      %p317 = pneg %p316
      // Predicated region
      $region49: #{tpu_custom_call.1} parent=5 // pred_check
        _
      $region50: #{tpu_custom_call.1} parent=5 // pred_check_branch
        %319 = sbr.rel (%p316) target = $region52
      $region51: #{tpu_custom_call.1} parent=5 // pred_region
        %s320 = ssub.s32 %s22, 1
        %s321 = sand.u32 %s35, 1
        %s322 = scalar_lea.sflag [#allocation3], %s321
        %s323 = sand.u32 %s35, 1
        %s324 = smul.addr %s323, 8
        %s325 = scalar_lea.vmem [#allocation2], %s324
        // Predicated region
        $region53: #{tpu_custom_call.1} parent=51 // pred_check
          %p326 = pneg %p48
        $region54: #{tpu_custom_call.1} parent=51 // pred_check_branch
          %328 = sbr.rel (%p326) target = $region56
        $region55: #{tpu_custom_call.1} parent=51 // pred_region
          %330 = dma.done %s322, 128
        $region56: #{tpu_custom_call.1} parent=51 // pred_fallthru
          _
        // Predicated region
        $region57: #{tpu_custom_call.1} parent=51 // pred_check
          %p331 = pneg %p69
        $region58: #{tpu_custom_call.1} parent=51 // pred_check_branch
          %333 = sbr.rel (%p331) target = $region60
        $region59: #{tpu_custom_call.1} parent=51 // pred_region
          %335 = dma.done [#allocation6], 384
        $region60: #{tpu_custom_call.1} parent=51 // pred_fallthru
          _
        // Predicated region
        $region61: #{tpu_custom_call.1} parent=51 // pred_check
          %p336 = pneg %p90
        $region62: #{tpu_custom_call.1} parent=51 // pred_check_branch
          %338 = sbr.rel (%p336) target = $region64
        $region63: #{tpu_custom_call.1} parent=51 // pred_region
          %340 = dma.done [#allocation6], 1536
        $region64: #{tpu_custom_call.1} parent=51 // pred_fallthru
          _
        // Predicated region
        $region65: #{tpu_custom_call.1} parent=51 // pred_check
          %p341 = pneg %p174
        $region66: #{tpu_custom_call.1} parent=51 // pred_check_branch
          %343 = sbr.rel (%p341) target = $region68
        $region67: #{tpu_custom_call.1} parent=51 // pred_region
          %345 = dma.done [#allocation9], 128
        $region68: #{tpu_custom_call.1} parent=51 // pred_fallthru
          _
        %s346 = sand.u32 %s35, 1
        %s347 = scalar_lea.sflag [#allocation3], %s346
        %s348 = sand.u32 %s35, 1
        %s349 = smul.addr %s348, 8
        %s350 = scalar_lea.vmem [#allocation2], %s349
        %p351 = pneg %p48
        %p352 = pneg %p45
        %p353 = pneg %p69
        %p354 = pneg %p66
        %p355 = pneg %p90
        %p356 = pneg %p87
        %p357 = pneg %p111
        %p358 = pneg %p108
        %p359 = pneg %p132
        %p360 = pneg %p129
        %p361 = pneg %p153
        %p362 = pneg %p150
        %p363 = pneg %p174
        %p364 = pneg %p171
        %p365 = pneg %p195
        %p366 = pneg %p192
        %p367 = pneg %p221
        %p368 = pneg %p218
        %s369 = sand.u32 %s208, 1
        %s370 = scalar_lea.sflag [#allocation4], %s369
        %s371 = sand.u32 %s208, 1
        %s372 = smul.addr %s371, 8
        %s373 = scalar_lea.vmem [#allocation10], %s372
        %v375 = vld [vmem:[%s325] sm:$0xf]
        %v376 = vld [vmem:[%s325 + $0x4] sm:$0xf]
        %v377 = vld [vmem:[#allocation5] sm:$0xf]
        %v378 = vld [vmem:[#allocation5 + $0x4] sm:$0xf]
        %v381 = vunpack.c.l.b16 %v377
        %v382 = vunpack.c.l.b16 %v378
        %v383 = vpack.c.b16 %v382, %v381
        %v386 = vunpack.c.l.b16 %v375
        %v387 = vunpack.c.l.b16 %v376
        %v388 = vpack.c.b16 %v387, %v386
        %vm390 = vcmask 130048
        %v392 = vsel %vm390, %v383, 0
        %394 = vmatpush.bf16.msra.mxu0 0
        %395 = vmatpush.bf16.msra.mxu0 0
        %396 = vmatpush.bf16.msra.mxu0 0
        %397 = vmatpush.bf16.msra.mxu0 0
        %398 = vmatpush.bf16.msra.mxu0 0
        %399 = vmatpush.bf16.msra.mxu0 0
        %400 = vmatpush.bf16.msra.mxu0 0
        %401 = vmatpush.bf16.msra.mxu0 %v388
        %402 = vmatmul.bf16.gmra.mxu0 %v392
        %v403 = vpop.f32.mrf.mxu0
        %v404 = vadd.f32 0.0, %v403
        %v405 = vpop.f32.mrf.mxu0
        %v406 = vadd.f32 0.0, %v405
        %407 = vdwg.mxu0
        %v408 = vpack.c.bf16 %v404, %v404
        %v409 = vpack.c.bf16 %v406, %v406
        %s410 = scalar_lea.vmem [#allocation5], 8
        %v411 = vld [vmem:[%s410] sm:$0xf]
        %v412 = vld [vmem:[%s410 + $0x4] sm:$0xf]
        %v415 = vunpack.c.l.b16 %v411
        %v416 = vunpack.c.l.b16 %v412
        %v417 = vpack.c.b16 %v416, %v415
        %v419 = vsel %vm390, %v417, 0
        %421 = vmatpush.bf16.msra.mxu0 0
        %422 = vmatpush.bf16.msra.mxu0 0
        %423 = vmatpush.bf16.msra.mxu0 0
        %424 = vmatpush.bf16.msra.mxu0 0
        %425 = vmatpush.bf16.msra.mxu0 0
        %426 = vmatpush.bf16.msra.mxu0 0
        %427 = vmatpush.bf16.msra.mxu0 0
        %428 = vmatpush.bf16.msra.mxu0 %v388
        %429 = vmatmul.bf16.gmra.mxu0 %v419
        %v430 = vpop.f32.mrf.mxu0
        %v431 = vadd.f32 0.0, %v430
        %v432 = vpop.f32.mrf.mxu0
        %v433 = vadd.f32 0.0, %v432
        %434 = vdwg.mxu0
        %v435 = vpack.c.bf16 %v431, %v431
        %v436 = vpack.c.bf16 %v433, %v433
        %s437 = scalar_lea.vmem [#allocation5], 16
        %v438 = vld [vmem:[%s437] sm:$0xf]
        %v439 = vld [vmem:[%s437 + $0x4] sm:$0xf]
        %v442 = vunpack.c.l.b16 %v438
        %v443 = vunpack.c.l.b16 %v439
        %v444 = vpack.c.b16 %v443, %v442
        %v446 = vsel %vm390, %v444, 0
        %448 = vmatpush.bf16.msra.mxu0 0
        %449 = vmatpush.bf16.msra.mxu0 0
        %450 = vmatpush.bf16.msra.mxu0 0
        %451 = vmatpush.bf16.msra.mxu0 0
        %452 = vmatpush.bf16.msra.mxu0 0
        %453 = vmatpush.bf16.msra.mxu0 0
        %454 = vmatpush.bf16.msra.mxu0 0
        %455 = vmatpush.bf16.msra.mxu0 %v388
        %456 = vmatmul.bf16.gmra.mxu0 %v446
        %v457 = vpop.f32.mrf.mxu0
        %v458 = vadd.f32 0.0, %v457
        %v459 = vpop.f32.mrf.mxu0
        %v460 = vadd.f32 0.0, %v459
        %461 = vdwg.mxu0
        %v462 = vpack.c.bf16 %v458, %v458
        %v463 = vpack.c.bf16 %v460, %v460
        %v466 = vunpack.c.l.b16 %v408
        %v467 = vunpack.c.l.b16 %v409
        %v468 = vpack.c.b16 %v467, %v466
        %v471 = vunpack.c.l.b16 %v435
        %v472 = vunpack.c.l.b16 %v436
        %v473 = vpack.c.b16 %v472, %v471
        %474 = vrot.lane.b32.xlu0 %v473, 64
        %v475 = vpop.permute.xlu0 %474
        %v478 = vunpack.c.l.b16 %v462
        %v479 = vunpack.c.l.b16 %v463
        %v480 = vpack.c.b16 %v479, %v478
        %vm481 = vcmask 523264
        %v484 = vsel %vm481, %v468, %v475
        %v486 = vld [vmem:[#allocation7] sm:$0xf]
        %v487 = vld [vmem:[#allocation7 + $0x4] sm:$0xf]
        %v488 = vld [vmem:[#allocation7 + $0x8] sm:$0xf]
        %v489 = vld [vmem:[#allocation7 + $0xc] sm:$0xf]
        %v490 = vld [vmem:[#allocation7 + $0x10] sm:$0xf]
        %v491 = vld [vmem:[#allocation7 + $0x14] sm:$0xf]
        %v492 = vld [vmem:[#allocation7 + $0x18] sm:$0xf]
        %v493 = vld [vmem:[#allocation7 + $0x1c] sm:$0xf]
        %v494 = vld [vmem:[#allocation7 + $0x20] sm:$0xf]
        %v495 = vld [vmem:[#allocation7 + $0x24] sm:$0xf]
        %v496 = vld [vmem:[#allocation7 + $0x28] sm:$0xf]
        %v497 = vld [vmem:[#allocation7 + $0x2c] sm:$0xf]
        %v498 = vld [vmem:[#allocation7 + $0x30] sm:$0xf]
        %v499 = vld [vmem:[#allocation7 + $0x34] sm:$0xf]
        %v500 = vld [vmem:[#allocation7 + $0x38] sm:$0xf]
        %v501 = vld [vmem:[#allocation7 + $0x3c] sm:$0xf]
        %v502 = vld [vmem:[#allocation7 + $0x40] sm:$0xf]
        %v503 = vld [vmem:[#allocation7 + $0x44] sm:$0xf]
        %v504 = vld [vmem:[#allocation7 + $0x48] sm:$0xf]
        %v505 = vld [vmem:[#allocation7 + $0x4c] sm:$0xf]
        %v506 = vld [vmem:[#allocation7 + $0x50] sm:$0xf]
        %v507 = vld [vmem:[#allocation7 + $0x54] sm:$0xf]
        %v508 = vld [vmem:[#allocation7 + $0x58] sm:$0xf]
        %v509 = vld [vmem:[#allocation7 + $0x5c] sm:$0xf]
        %v510 = vld [vmem:[%s3] sm:$0x1]
        %v512 = vperm.slane %v510, 0
        %v538 = vunpack.c.l.b16 %v486
        %v539 = vunpack.c.l.b16 %v487
        %v540 = vunpack.c.l.b16 %v488
        %v541 = vunpack.c.l.b16 %v489
        %v542 = vunpack.c.l.b16 %v490
        %v543 = vunpack.c.l.b16 %v491
        %v544 = vunpack.c.l.b16 %v492
        %v545 = vunpack.c.l.b16 %v493
        %v546 = vunpack.c.l.b16 %v494
        %v547 = vunpack.c.l.b16 %v495
        %v548 = vunpack.c.l.b16 %v496
        %v549 = vunpack.c.l.b16 %v497
        %v550 = vunpack.c.l.b16 %v498
        %v551 = vunpack.c.l.b16 %v499
        %v552 = vunpack.c.l.b16 %v500
        %v553 = vunpack.c.l.b16 %v501
        %v554 = vunpack.c.l.b16 %v502
        %v555 = vunpack.c.l.b16 %v503
        %v556 = vunpack.c.l.b16 %v504
        %v557 = vunpack.c.l.b16 %v505
        %v558 = vunpack.c.l.b16 %v506
        %v559 = vunpack.c.l.b16 %v507
        %v560 = vunpack.c.l.b16 %v508
        %v561 = vunpack.c.l.b16 %v509
        %v562 = vpack.c.b16 %v539, %v538
        %v563 = vpack.c.b16 %v541, %v540
        %v564 = vpack.c.b16 %v543, %v542
        %v565 = vpack.c.b16 %v545, %v544
        %v566 = vpack.c.b16 %v547, %v546
        %v567 = vpack.c.b16 %v549, %v548
        %v568 = vpack.c.b16 %v551, %v550
        %v569 = vpack.c.b16 %v553, %v552
        %v570 = vpack.c.b16 %v555, %v554
        %v571 = vpack.c.b16 %v557, %v556
        %v572 = vpack.c.b16 %v559, %v558
        %v573 = vpack.c.b16 %v561, %v560
        %v587 = vsel %vm481, %v480, 0
        %589 = vmatpush.bf16.msra.mxu0 %v569
        %590 = vmatpush.bf16.msra.mxu0 %v568
        %591 = vmatpush.bf16.msra.mxu0 %v567
        %592 = vmatpush.bf16.msra.mxu0 %v566
        %593 = vmatpush.bf16.msra.mxu0 %v565
        %594 = vmatpush.bf16.msra.mxu0 %v564
        %595 = vmatpush.bf16.msra.mxu0 %v563
        %596 = vmatpush.bf16.msra.mxu0 %v562
        %597 = vmatmul.bf16.gmra.mxu0 %v484
        %v598 = vpop.f32.mrf.mxu0
        %v599 = vadd.f32 %v512, %v598
        %v600 = vpop.f32.mrf.mxu0
        %v601 = vadd.f32 %v512, %v600
        %602 = vdwg.mxu0
        %603 = vmatpush.bf16.msra.mxu0 0
        %604 = vmatpush.bf16.msra.mxu0 0
        %605 = vmatpush.bf16.msra.mxu0 0
        %606 = vmatpush.bf16.msra.mxu0 0
        %607 = vmatpush.bf16.msra.mxu0 %v573
        %608 = vmatpush.bf16.msra.mxu0 %v572
        %609 = vmatpush.bf16.msra.mxu0 %v571
        %610 = vmatpush.bf16.msra.mxu0 %v570
        %611 = vmatmul.bf16.gmra.mxu0 %v587
        %v612 = vpop.f32.mrf.mxu0
        %v613 = vadd.f32 %v599, %v612
        %v614 = vpop.f32.mrf.mxu0
        %v615 = vadd.f32 %v601, %v614
        %616 = vdwg.mxu0
        %vm617 = vcmp.gt.f32.partialorder %v613, 0.0
        %vm618 = vcmp.gt.f32.partialorder %v615, 0.0
        %v619 = vmul.f32 %v613, 0.2
        %v620 = vmul.f32 %v615, 0.2
        %v621 = vsel %vm617, %v613, %v619
        %v622 = vsel %vm618, %v615, %v620
        %v623 = vpack.c.bf16 %v622, %v621
        %624 = vmatpush.bf16.msra.mxu0 0
        %625 = vmatpush.bf16.msra.mxu0 0
        %626 = vmatpush.bf16.msra.mxu0 0
        %627 = vmatpush.bf16.msra.mxu0 0
        %628 = vmatpush.bf16.msra.mxu0 0
        %629 = vmatpush.bf16.msra.mxu0 0
        %630 = vmatpush.bf16.msra.mxu0 0
        %631 = vmatpush.bf16.msra.mxu0 %v623
        %632 = vmatmul.bf16.gmra.mxu0 %v392
        %v633 = vpop.f32.mrf.mxu0
        %v634 = vadd.f32 0.0, %v633
        %v635 = vpop.f32.mrf.mxu0
        %v636 = vadd.f32 0.0, %v635
        %637 = vdwg.mxu0
        %v638 = vpack.c.bf16 %v634, %v634
        %v639 = vpack.c.bf16 %v636, %v636
        %640 = vmatpush.bf16.msra.mxu0 0
        %641 = vmatpush.bf16.msra.mxu0 0
        %642 = vmatpush.bf16.msra.mxu0 0
        %643 = vmatpush.bf16.msra.mxu0 0
        %644 = vmatpush.bf16.msra.mxu0 0
        %645 = vmatpush.bf16.msra.mxu0 0
        %646 = vmatpush.bf16.msra.mxu0 0
        %647 = vmatpush.bf16.msra.mxu0 %v623
        %648 = vmatmul.bf16.gmra.mxu0 %v419
        %v649 = vpop.f32.mrf.mxu0
        %v650 = vadd.f32 0.0, %v649
        %v651 = vpop.f32.mrf.mxu0
        %v652 = vadd.f32 0.0, %v651
        %653 = vdwg.mxu0
        %v654 = vpack.c.bf16 %v650, %v650
        %v655 = vpack.c.bf16 %v652, %v652
        %656 = vmatpush.bf16.msra.mxu0 0
        %657 = vmatpush.bf16.msra.mxu0 0
        %658 = vmatpush.bf16.msra.mxu0 0
        %659 = vmatpush.bf16.msra.mxu0 0
        %660 = vmatpush.bf16.msra.mxu0 0
        %661 = vmatpush.bf16.msra.mxu0 0
        %662 = vmatpush.bf16.msra.mxu0 0
        %663 = vmatpush.bf16.msra.mxu0 %v623
        %664 = vmatmul.bf16.gmra.mxu0 %v446
        %v665 = vpop.f32.mrf.mxu0
        %v666 = vadd.f32 0.0, %v665
        %v667 = vpop.f32.mrf.mxu0
        %v668 = vadd.f32 0.0, %v667
        %669 = vdwg.mxu0
        %v670 = vpack.c.bf16 %v666, %v666
        %v671 = vpack.c.bf16 %v668, %v668
        %v674 = vunpack.c.l.b16 %v638
        %v675 = vunpack.c.l.b16 %v639
        %v676 = vpack.c.b16 %v675, %v674
        %v680 = vunpack.c.l.b16 %v654
        %v681 = vunpack.c.l.b16 %v655
        %v682 = vpack.c.b16 %v681, %v680
        %v686 = vunpack.c.l.b16 %v670
        %v687 = vunpack.c.l.b16 %v671
        %v688 = vpack.c.b16 %v687, %v686
        %v690 = vld [vmem:[%s4] sm:$0xf]
        %v691 = vld [vmem:[%s4 + $0x4] sm:$0xf]
        %v692 = vld [vmem:[%s4 + $0x8] sm:$0xf]
        %v693 = vld [vmem:[%s4 + $0xc] sm:$0xf]
        %v694 = vld [vmem:[%s4 + $0x10] sm:$0xf]
        %v695 = vld [vmem:[%s4 + $0x14] sm:$0xf]
        %v696 = vld [vmem:[%s4 + $0x18] sm:$0xf]
        %v697 = vld [vmem:[%s4 + $0x1c] sm:$0xf]
        %v698 = vld [vmem:[%s4 + $0x20] sm:$0xf]
        %v699 = vld [vmem:[%s4 + $0x24] sm:$0xf]
        %v700 = vld [vmem:[%s4 + $0x28] sm:$0xf]
        %v701 = vld [vmem:[%s4 + $0x2c] sm:$0xf]
        %v702 = vld [vmem:[%s4 + $0x30] sm:$0xf]
        %v703 = vld [vmem:[%s4 + $0x34] sm:$0xf]
        %v704 = vld [vmem:[%s4 + $0x38] sm:$0xf]
        %v705 = vld [vmem:[%s4 + $0x3c] sm:$0xf]
        %v706 = vld [vmem:[%s4 + $0x40] sm:$0xf]
        %v707 = vld [vmem:[%s4 + $0x44] sm:$0xf]
        %v708 = vld [vmem:[%s4 + $0x48] sm:$0xf]
        %v709 = vld [vmem:[%s4 + $0x4c] sm:$0xf]
        %v710 = vld [vmem:[%s4 + $0x50] sm:$0xf]
        %v711 = vld [vmem:[%s4 + $0x54] sm:$0xf]
        %v712 = vld [vmem:[%s4 + $0x58] sm:$0xf]
        %v713 = vld [vmem:[%s4 + $0x5c] sm:$0xf]
        %v714 = vld [vmem:[%s4 + $0x60] sm:$0xf]
        %v715 = vld [vmem:[%s4 + $0x64] sm:$0xf]
        %v716 = vld [vmem:[%s4 + $0x68] sm:$0xf]
        %v717 = vld [vmem:[%s4 + $0x6c] sm:$0xf]
        %v718 = vld [vmem:[%s4 + $0x70] sm:$0xf]
        %v719 = vld [vmem:[%s4 + $0x74] sm:$0xf]
        %v720 = vld [vmem:[%s4 + $0x78] sm:$0xf]
        %v721 = vld [vmem:[%s4 + $0x7c] sm:$0xf]
        %v722 = vld [vmem:[%s4 + $0x80] sm:$0xf]
        %v723 = vld [vmem:[%s4 + $0x84] sm:$0xf]
        %v724 = vld [vmem:[%s4 + $0x88] sm:$0xf]
        %v725 = vld [vmem:[%s4 + $0x8c] sm:$0xf]
        %v726 = vld [vmem:[%s4 + $0x90] sm:$0xf]
        %v727 = vld [vmem:[%s4 + $0x94] sm:$0xf]
        %v728 = vld [vmem:[%s4 + $0x98] sm:$0xf]
        %v729 = vld [vmem:[%s4 + $0x9c] sm:$0xf]
        %v730 = vld [vmem:[%s4 + $0xa0] sm:$0xf]
        %v731 = vld [vmem:[%s4 + $0xa4] sm:$0xf]
        %v732 = vld [vmem:[%s4 + $0xa8] sm:$0xf]
        %v733 = vld [vmem:[%s4 + $0xac] sm:$0xf]
        %v734 = vld [vmem:[%s4 + $0xb0] sm:$0xf]
        %v735 = vld [vmem:[%s4 + $0xb4] sm:$0xf]
        %v736 = vld [vmem:[%s4 + $0xb8] sm:$0xf]
        %v737 = vld [vmem:[%s4 + $0xbc] sm:$0xf]
        %v738 = vld [vmem:[%s5] sm:$0x1]
        %v740 = vperm.slane %v738, 0
        %v790 = vunpack.c.l.b16 %v690
        %v791 = vunpack.c.l.b16 %v691
        %v792 = vunpack.c.l.b16 %v692
        %v793 = vunpack.c.l.b16 %v693
        %v794 = vunpack.c.l.b16 %v694
        %v795 = vunpack.c.l.b16 %v695
        %v796 = vunpack.c.l.b16 %v696
        %v797 = vunpack.c.l.b16 %v697
        %v798 = vunpack.c.l.b16 %v698
        %v799 = vunpack.c.l.b16 %v699
        %v800 = vunpack.c.l.b16 %v700
        %v801 = vunpack.c.l.b16 %v701
        %v802 = vunpack.c.l.b16 %v702
        %v803 = vunpack.c.l.b16 %v703
        %v804 = vunpack.c.l.b16 %v704
        %v805 = vunpack.c.l.b16 %v705
        %v806 = vunpack.c.l.b16 %v706
        %v807 = vunpack.c.l.b16 %v707
        %v808 = vunpack.c.l.b16 %v708
        %v809 = vunpack.c.l.b16 %v709
        %v810 = vunpack.c.l.b16 %v710
        %v811 = vunpack.c.l.b16 %v711
        %v812 = vunpack.c.l.b16 %v712
        %v813 = vunpack.c.l.b16 %v713
        %v814 = vunpack.c.l.b16 %v714
        %v815 = vunpack.c.l.b16 %v715
        %v816 = vunpack.c.l.b16 %v716
        %v817 = vunpack.c.l.b16 %v717
        %v818 = vunpack.c.l.b16 %v718
        %v819 = vunpack.c.l.b16 %v719
        %v820 = vunpack.c.l.b16 %v720
        %v821 = vunpack.c.l.b16 %v721
        %v822 = vunpack.c.l.b16 %v722
        %v823 = vunpack.c.l.b16 %v723
        %v824 = vunpack.c.l.b16 %v724
        %v825 = vunpack.c.l.b16 %v725
        %v826 = vunpack.c.l.b16 %v726
        %v827 = vunpack.c.l.b16 %v727
        %v828 = vunpack.c.l.b16 %v728
        %v829 = vunpack.c.l.b16 %v729
        %v830 = vunpack.c.l.b16 %v730
        %v831 = vunpack.c.l.b16 %v731
        %v832 = vunpack.c.l.b16 %v732
        %v833 = vunpack.c.l.b16 %v733
        %v834 = vunpack.c.l.b16 %v734
        %v835 = vunpack.c.l.b16 %v735
        %v836 = vunpack.c.l.b16 %v736
        %v837 = vunpack.c.l.b16 %v737
        %v838 = vpack.c.b16 %v791, %v790
        %v839 = vpack.c.b16 %v793, %v792
        %v840 = vpack.c.b16 %v795, %v794
        %v841 = vpack.c.b16 %v797, %v796
        %v842 = vpack.c.b16 %v799, %v798
        %v843 = vpack.c.b16 %v801, %v800
        %v844 = vpack.c.b16 %v803, %v802
        %v845 = vpack.c.b16 %v805, %v804
        %v846 = vpack.c.b16 %v807, %v806
        %v847 = vpack.c.b16 %v809, %v808
        %v848 = vpack.c.b16 %v811, %v810
        %v849 = vpack.c.b16 %v813, %v812
        %v850 = vpack.c.b16 %v815, %v814
        %v851 = vpack.c.b16 %v817, %v816
        %v852 = vpack.c.b16 %v819, %v818
        %v853 = vpack.c.b16 %v821, %v820
        %v854 = vpack.c.b16 %v823, %v822
        %v855 = vpack.c.b16 %v825, %v824
        %v856 = vpack.c.b16 %v827, %v826
        %v857 = vpack.c.b16 %v829, %v828
        %v858 = vpack.c.b16 %v831, %v830
        %v859 = vpack.c.b16 %v833, %v832
        %v860 = vpack.c.b16 %v835, %v834
        %v861 = vpack.c.b16 %v837, %v836
        %886 = vmatpush.bf16.msra.mxu0 %v845
        %887 = vmatpush.bf16.msra.mxu0 %v844
        %888 = vmatpush.bf16.msra.mxu0 %v843
        %889 = vmatpush.bf16.msra.mxu0 %v842
        %890 = vmatpush.bf16.msra.mxu0 %v841
        %891 = vmatpush.bf16.msra.mxu0 %v840
        %892 = vmatpush.bf16.msra.mxu0 %v839
        %893 = vmatpush.bf16.msra.mxu0 %v838
        %894 = vmatmul.bf16.gmra.mxu0 %v676
        %v895 = vpop.f32.mrf.mxu0
        %v896 = vadd.f32 %v740, %v895
        %v897 = vpop.f32.mrf.mxu0
        %v898 = vadd.f32 %v740, %v897
        %899 = vdwg.mxu0
        %900 = vmatpush.bf16.msra.mxu0 %v853
        %901 = vmatpush.bf16.msra.mxu0 %v852
        %902 = vmatpush.bf16.msra.mxu0 %v851
        %903 = vmatpush.bf16.msra.mxu0 %v850
        %904 = vmatpush.bf16.msra.mxu0 %v849
        %905 = vmatpush.bf16.msra.mxu0 %v848
        %906 = vmatpush.bf16.msra.mxu0 %v847
        %907 = vmatpush.bf16.msra.mxu0 %v846
        %908 = vmatmul.bf16.gmra.mxu0 %v682
        %v909 = vpop.f32.mrf.mxu0
        %v910 = vadd.f32 %v896, %v909
        %v911 = vpop.f32.mrf.mxu0
        %v912 = vadd.f32 %v898, %v911
        %913 = vdwg.mxu0
        %914 = vmatpush.bf16.msra.mxu0 %v861
        %915 = vmatpush.bf16.msra.mxu0 %v860
        %916 = vmatpush.bf16.msra.mxu0 %v859
        %917 = vmatpush.bf16.msra.mxu0 %v858
        %918 = vmatpush.bf16.msra.mxu0 %v857
        %919 = vmatpush.bf16.msra.mxu0 %v856
        %920 = vmatpush.bf16.msra.mxu0 %v855
        %921 = vmatpush.bf16.msra.mxu0 %v854
        %922 = vmatmul.bf16.gmra.mxu0 %v688
        %v923 = vpop.f32.mrf.mxu0
        %v924 = vadd.f32 %v910, %v923
        %v925 = vpop.f32.mrf.mxu0
        %v926 = vadd.f32 %v912, %v925
        %927 = vdwg.mxu0
        %vm928 = vcmp.gt.f32.partialorder %v924, 0.0
        %vm929 = vcmp.gt.f32.partialorder %v926, 0.0
        %v930 = vmul.f32 %v924, 0.2
        %v931 = vmul.f32 %v926, 0.2
        %v932 = vsel %vm928, %v924, %v930
        %v933 = vsel %vm929, %v926, %v931
        %v934 = vld [vmem:[#allocation8] sm:$0xff]
        %v936 = vsel %vm390, %v934, 0
        %938 = vmatpush.msra.mxu0 0.0
        %939 = vmatpush.msra.mxu0 0.0
        %940 = vmatpush.msra.mxu0 0.0
        %941 = vmatpush.msra.mxu0 0.0
        %942 = vmatpush.msra.mxu0 0.0
        %943 = vmatpush.msra.mxu0 0.0
        %944 = vmatpush.msra.mxu0 0.0
        %945 = vmatpush.msra.mxu0 0.0
        %946 = vmatpush.msra.mxu0 0.0
        %947 = vmatpush.msra.mxu0 0.0
        %948 = vmatpush.msra.mxu0 0.0
        %949 = vmatpush.msra.mxu0 0.0
        %950 = vmatpush.msra.mxu0 0.0
        %951 = vmatpush.msra.mxu0 0.0
        %952 = vmatpush.msra.mxu0 %v933
        %953 = vmatpush.msra.mxu0 %v932
        %954 = vmatmul.f32.gmra.mxu0 %v936
        %v955 = vpop.f32.mrf.mxu0
        %v956 = vadd.f32 0.0, %v955
        %957 = vdwg.mxu0
        %v958 = vld [vmem:[%s7] sm:$0xff]
        %v959 = vld [vmem:[%s7 + $0x8] sm:$0xff]
        %v960 = vld [vmem:[%s7 + $0x10] sm:$0xff]
        %v961 = vld [vmem:[%s7 + $0x18] sm:$0xff]
        %v962 = vld [vmem:[%s7 + $0x20] sm:$0xff]
        %v963 = vld [vmem:[%s7 + $0x28] sm:$0xff]
        %v964 = vld [vmem:[%s7 + $0x30] sm:$0xff]
        %v965 = vld [vmem:[%s7 + $0x38] sm:$0xff]
        %v966 = vld [vmem:[%s7 + $0x40] sm:$0xff]
        %v967 = vld [vmem:[%s7 + $0x48] sm:$0xff]
        %v968 = vld [vmem:[%s7 + $0x50] sm:$0xff]
        %v969 = vld [vmem:[%s7 + $0x58] sm:$0xff]
        %v970 = vld [vmem:[%s7 + $0x60] sm:$0xff]
        %v971 = vld [vmem:[%s7 + $0x68] sm:$0xff]
        %v972 = vld [vmem:[%s7 + $0x70] sm:$0xff]
        %v973 = vld [vmem:[%s7 + $0x78] sm:$0xff]
        %974 = vmatpush.msra.mxu0 %v973
        %975 = vmatpush.msra.mxu0 %v972
        %976 = vmatpush.msra.mxu0 %v971
        %977 = vmatpush.msra.mxu0 %v970
        %978 = vmatpush.msra.mxu0 %v969
        %979 = vmatpush.msra.mxu0 %v968
        %980 = vmatpush.msra.mxu0 %v967
        %981 = vmatpush.msra.mxu0 %v966
        %982 = vmatpush.msra.mxu0 %v965
        %983 = vmatpush.msra.mxu0 %v964
        %984 = vmatpush.msra.mxu0 %v963
        %985 = vmatpush.msra.mxu0 %v962
        %986 = vmatpush.msra.mxu0 %v961
        %987 = vmatpush.msra.mxu0 %v960
        %988 = vmatpush.msra.mxu0 %v959
        %989 = vmatpush.msra.mxu0 %v958
        %990 = vmatmul.f32.gmra.mxu0 %v956
        %v991 = vpop.f32.mrf.mxu0
        %v992 = vadd.f32 0.0, %v991
        %993 = vdwg.mxu0
        %994 = vst.msk [vmem:[%s373] sm:$0xff] %vm481, %v992
        %s995 = sand.u32 %s208, 1
        %s996 = scalar_lea.sflag [#allocation4], %s995
        %s997 = sand.u32 %s208, 1
        %s998 = smul.addr %s997, 8
        %s999 = scalar_lea.vmem [#allocation10], %s998
        // Predicated region
        $region69: #{tpu_custom_call.1} parent=51 // pred_check
          %p1000 = pneg %p218
        $region70: #{tpu_custom_call.1} parent=51 // pred_check_branch
          %1002 = sbr.rel (%p1000) target = $region72
        $region71: #{tpu_custom_call.1} parent=51 // pred_region
          %1004 = vsyncadd %s996, 0
          %s1005 = smul.addr %s27, 8
          %s1006 = scalar_lea.hbm %s8, %s1005
          %s1008 = sshll.u32 %s999, 4
          %s1009 = int_to_ptr.vmem [resolvable:$true] %s1008
          %s1010 = sshll.u32 %s1006, 4
          %s1011 = int_to_ptr.hbm [resolvable:$true] %s1010
          %1013 = dma.vmem_to_hbm [thread:$0]  %s1009, 128, %s1011, %s996
        $region72: #{tpu_custom_call.1} parent=51 // pred_fallthru
          _
      $region52: #{tpu_custom_call.1} parent=5 // pred_fallthru
        _
      %p1014 = scmp.le.s32.totalorder 2, %s22
      // Predicated region
      $region73: #{tpu_custom_call.1} parent=5 // pred_check
        %p1015 = pneg %p1014
      $region74: #{tpu_custom_call.1} parent=5 // pred_check_branch
        %1017 = sbr.rel (%p1015) target = $region76
      $region75: #{tpu_custom_call.1} parent=5 // pred_region
        %s1018 = ssub.s32 %s22, 2
        // Predicated region
        $region77: #{tpu_custom_call.1} parent=75 // pred_check
          %p1019 = pneg %p224
        $region78: #{tpu_custom_call.1} parent=75 // pred_check_branch
          %1021 = sbr.rel (%p1019) target = $region80
        $region79: #{tpu_custom_call.1} parent=75 // pred_region
          %s1022 = sand.u32 %s209, 1
          %s1023 = scalar_lea.sflag [#allocation4], %s1022
          %s1024 = sand.u32 %s209, 1
          %s1025 = smul.addr %s1024, 8
          %s1026 = scalar_lea.vmem [#allocation10], %s1025
          %1028 = dma.done %s1023, 128
        $region80: #{tpu_custom_call.1} parent=75 // pred_fallthru
          _
      $region76: #{tpu_custom_call.1} parent=5 // pred_fallthru
        _
    $region6: #{tpu_custom_call.1} parent=1 // loop_footer
      %s26 = sadd.s32 1, %s22
    $region7: #{tpu_custom_call.1} parent=1 // loop_footer_branch
      %21 = sbr.rel target = $region3
    $region8: #{tpu_custom_call.1} parent=1 // loop_exit
      _
    %1029 = vsyncpa [#allocation3], 1
    %s1030 = scalar_lea.sflag [#allocation3], 1
    %1031 = vsyncpa %s1030, 1
    %1032 = vsyncpa [#allocation6], 1
    %1033 = vsyncpa [#allocation9], 1
    %1034 = vsyncpa [#allocation4], 1
    %s1035 = scalar_lea.sflag [#allocation4], 1
    %1036 = vsyncpa %s1035, 1

</llo_original>
